<compile_context>
chip_gen: v6e
topology: v6e:2x2x1
jax: 0.10.0
libtpu: 0.0.40
codegen_flags: <defaults>
</compile_context>

<pallas_src>
import jax
import jax.numpy as jnp
from jax.experimental import pallas as pl
from jax.experimental.pallas import tpu as pltpu


def _round_up(x, m):
    return ((x + m - 1) // m) * m


def _mlp_kernel(x_ref, w1_ref, b1_ref, w2_ref, b2_ref, w3_ref, b3_ref, out_ref):
    # One batch tile per grid step: 3 MXU matmuls + VPU bias/relu.
    # Both weights AND activations are cast to the weight dtype (bf16 by default, single
    # MXU pass on v5e/v6e/v7x); biases and accumulation stay f32.
    wdt = w1_ref.dtype
    x = x_ref[...].astype(wdt)

    h1 = jnp.dot(x, w1_ref[...], preferred_element_type=jnp.float32) + b1_ref[...]
    h1 = jnp.maximum(h1, 0.0)

    h2 = jnp.dot(h1.astype(wdt), w2_ref[...], preferred_element_type=jnp.float32) + b2_ref[...]
    h2 = jnp.maximum(h2, 0.0)

    # Lane-dense store: out_ref is [tb, 128*ceil(n_actions/128)] (padded columns are zero).
    out = jnp.dot(h2.astype(wdt), w3_ref[...], preferred_element_type=jnp.float32) + b3_ref[...]
    out_ref[...] = out.astype(out_ref.dtype)


def dqn_forward(state, params, *, block_b=2048, weights_dtype=jnp.bfloat16,
                out_dtype=jnp.float32, return_padded=False):
    """state: [B, 8] float32. params: dict of transposed weights/biases (see init_params).

    weights_dtype: MXU operand dtype (weights and activations); accumulation is f32.
    out_dtype:     dtype of the HBM writeback (bf16 halves the dominant output traffic).
    return_padded: return the lane-dense [B, 128*ceil(n_actions/128)] slab (padded columns
                   are exactly zero) instead of slicing to [B, n_actions] here.
    """
    w1, b1 = params["w1"], params["b1"]   # [8, 256],   [1, 256]
    w2, b2 = params["w2"], params["b2"]   # [256, 128], [1, 128]
    w3, b3 = params["w3"], params["b3"]   # [128, n_actions], [1, n_actions]
    B, F = state.shape
    n_actions = w3.shape[1]

    # --- lane-dense output: zero-pad fc3 out-dim up to a multiple of 128 ---
    n_pad = _round_up(max(n_actions, 128), 128)
    if n_pad != n_actions:
        w3 = jnp.zeros((w3.shape[0], n_pad), w3.dtype).at[:, :n_actions].set(w3)
        b3 = jnp.zeros((1, n_pad), b3.dtype).at[:, :n_actions].set(b3)

    w1c, w2c, w3c = (w.astype(weights_dtype) for w in (w1, w2, w3))
    b1f, b2f, b3f = (b.astype(jnp.float32) for b in (b1, b2, b3))

    x = state.astype(jnp.float32)

    # --- batch tiling ---
    # Big tiles amortize per-grid-step overhead; cap the tile at ceil(B/2) so mid-size
    # batches still produce >= 2 "parallel" tiles (both TensorCores on v7x).  The ragged
    # last tile is handled by Pallas block masking (no jnp.pad pre-pass over the input).
    block_b = max(8, _round_up(block_b, 8))
    tb = min(block_b, max(8, _round_up(pl.cdiv(B, 2), 8)))
    grid = (pl.cdiv(B, tb),)

    # Only needed if the tile is pushed past the default scoped-VMEM on v5e (16 MiB).
    vmem_limit = (48 * 1024 * 1024) if tb > 2048 else None

    resident = lambda a: pl.BlockSpec(a.shape, lambda i: (0,) * a.ndim)  # stays in VMEM

    out = pl.pallas_call(
        _mlp_kernel,
        out_shape=jax.ShapeDtypeStruct((B, n_pad), out_dtype),
        grid=grid,
        in_specs=[
            pl.BlockSpec((tb, F), lambda i: (i, 0)),   # state tile (K=8 left unpadded)
            resident(w1c), resident(b1f),
            resident(w2c), resident(b2f),
            resident(w3c), resident(b3f),
        ],
        out_specs=pl.BlockSpec((tb, n_pad), lambda i: (i, 0)),
        compiler_params=pltpu.CompilerParams(
            dimension_semantics=("parallel",),  # shard batch tiles across TCs on v7x
            vmem_limit_bytes=vmem_limit,
        ),
    )(x, w1c, b1f, w2c, b2f, w3c, b3f)

    if return_padded:
        return out              # [B, n_pad]; consumer argmaxes/slices the first n_actions
    # Jit dqn_forward together with its consumer so this slice fuses with the kernel output.
    return out[:, :n_actions]


def init_params(key, n_actions):
    """Deterministic init mirroring the PyTorch module:
    weights ~ Normal(0, 0.1); biases use nn.Linear default U(-1/sqrt(fan_in), 1/sqrt(fan_in)).
    Weights stored transposed ([in, out]) relative to torch's [out, in]."""
    dims = [(8, 256), (256, 128), (128, n_actions)]
    keys = jax.random.split(key, 2 * len(dims))
    params = {}
    for i, (fan_in, fan_out) in enumerate(dims):
        wk, bk = keys[2 * i], keys[2 * i + 1]
        w = 0.1 * jax.random.normal(wk, (fan_in, fan_out), dtype=jnp.float32)
        bound = 1.0 / jnp.sqrt(jnp.float32(fan_in))
        b = jax.random.uniform(bk, (1, fan_out), dtype=jnp.float32,
                               minval=-bound, maxval=bound)
        params[f"w{i + 1}"] = w
        params[f"b{i + 1}"] = b
    return params


def reference_forward(state, params):
    h1 = jnp.maximum(state @ params["w1"] + params["b1"], 0.0)
    h2 = jnp.maximum(h1 @ params["w2"] + params["b2"], 0.0)
    return h2 @ params["w3"] + params["b3"]


if __name__ == "__main__":
    key = jax.random.PRNGKey(0)
    k_param, k_state, k_big = jax.random.split(key, 3)

    n_actions = 4
    fc_inputs_length = 8  # self.fc_inputs_length in the module

    params = init_params(k_param, n_actions)

    fwd = jax.jit(dqn_forward,
                  static_argnames=("block_b", "weights_dtype", "out_dtype", "return_padded"))

    # Small (inference-style) batch, exact f32 path (matches PyTorch numerics).
    state_small = jax.random.normal(k_state, (8, fc_inputs_length), dtype=jnp.float32)
    out_small = jax.block_until_ready(fwd(state_small, params, weights_dtype=jnp.float32))
    ref_small = reference_forward(state_small, params)
    assert out_small.shape == (8, n_actions)
    assert jnp.allclose(out_small, ref_small, atol=1e-4, rtol=1e-4)

    # Replay-buffer-size batch: exercises the ragged 2-tile grid and lane-dense output.
    state_big = jax.random.normal(k_big, (1000, fc_inputs_length), dtype=jnp.float32)
    ref_big = reference_forward(state_big, params)

    out_big_f32 = jax.block_until_ready(fwd(state_big, params, weights_dtype=jnp.float32))
    assert out_big_f32.shape == (1000, n_actions)
    assert jnp.allclose(out_big_f32, ref_big, atol=1e-4, rtol=1e-4)

    # Default path: bf16 operands, f32 accumulation + f32 output — looser tolerance.
    out_big = jax.block_until_ready(fwd(state_big, params))
    assert out_big.shape == (1000, n_actions)
    assert jnp.allclose(out_big, ref_big, atol=5e-2, rtol=5e-2)

    # bf16 writeback + padded return (consumer would argmax over the first n_actions lanes).
    out_pad = jax.block_until_ready(
        fwd(state_big, params, out_dtype=jnp.bfloat16, return_padded=True))
    assert out_pad.shape == (1000, 128)
    assert jnp.allclose(out_pad[:, :n_actions].astype(jnp.float32), ref_big,
                        atol=1e-1, rtol=1e-1)
    assert jnp.all(out_pad[:, n_actions:] == 0)

    print("KERNEL_OK")
</pallas_src>

<mosaic_0001>
module attributes {stable_mosaic.version = 11 : i64} {
  func.func @_mlp_kernel(%arg0: i32, %arg1: memref<8x8xf32, #tpu.memory_space<vmem>>, %arg2: memref<8x256xf32, #tpu.memory_space<vmem>>, %arg3: memref<1x256xf32, #tpu.memory_space<vmem>>, %arg4: memref<256x128xf32, #tpu.memory_space<vmem>>, %arg5: memref<1x128xf32, #tpu.memory_space<vmem>>, %arg6: memref<128x128xf32, #tpu.memory_space<vmem>>, %arg7: memref<1x128xf32, #tpu.memory_space<vmem>>, %arg8: memref<8x128xf32, #tpu.memory_space<vmem>>) attributes {dimension_semantics = [#tpu.dimension_semantics<parallel>], iteration_bounds = array<i64: 1>, scalar_prefetch = 0 : i64, scratch_operands = 0 : i64, tpu.core_type = #tpu.core_type<tc>, window_params = [{transform_indices = @transform_0, window_bounds = array<i64: 8, 8>}, {pipeline_mode = #tpu.pipeline_mode<synchronous>, transform_indices = @transform_1, window_bounds = array<i64: 8, 256>}, {pipeline_mode = #tpu.pipeline_mode<synchronous>, transform_indices = @transform_2, window_bounds = array<i64: 1, 256>}, {pipeline_mode = #tpu.pipeline_mode<synchronous>, transform_indices = @transform_3, window_bounds = array<i64: 256, 128>}, {pipeline_mode = #tpu.pipeline_mode<synchronous>, transform_indices = @transform_4, window_bounds = array<i64: 1, 128>}, {pipeline_mode = #tpu.pipeline_mode<synchronous>, transform_indices = @transform_5, window_bounds = array<i64: 128, 128>}, {pipeline_mode = #tpu.pipeline_mode<synchronous>, transform_indices = @transform_6, window_bounds = array<i64: 1, 128>}, {transform_indices = @transform_7, window_bounds = array<i64: 8, 128>}]} {
    %c0 = arith.constant 0 : index
    %c0_0 = arith.constant 0 : index
    %0 = vector.load %arg1[%c0, %c0_0] : memref<8x8xf32, #tpu.memory_space<vmem>>, vector<8x8xf32>
    %c0_1 = arith.constant 0 : index
    %c0_2 = arith.constant 0 : index
    %1 = vector.load %arg2[%c0_1, %c0_2] : memref<8x256xf32, #tpu.memory_space<vmem>>, vector<8x256xf32>
    %cst = arith.constant dense<0.000000e+00> : vector<8x256xf32>
    %2 = tpu.matmul %0, %1, %cst {dimension_numbers = #tpu.dot_dimension_numbers<[1], [0], [0], [1], [0, 0, 1, 1], [], []>} : vector<8x8xf32>, vector<8x256xf32>, vector<8x256xf32> -> vector<8x256xf32>
    %c0_3 = arith.constant 0 : index
    %c0_4 = arith.constant 0 : index
    %3 = vector.load %arg3[%c0_3, %c0_4] : memref<1x256xf32, #tpu.memory_space<vmem>>, vector<1x256xf32>
    %4 = vector.broadcast %3 : vector<1x256xf32> to vector<8x256xf32>
    %5 = arith.addf %2, %4 : vector<8x256xf32>
    %cst_5 = arith.constant 0.000000e+00 : f32
    %6 = vector.broadcast %cst_5 : f32 to vector<8x256xf32>
    %7 = arith.maximumf %5, %6 : vector<8x256xf32>
    %c0_6 = arith.constant 0 : index
    %c0_7 = arith.constant 0 : index
    %8 = vector.load %arg4[%c0_6, %c0_7] : memref<256x128xf32, #tpu.memory_space<vmem>>, vector<256x128xf32>
    %cst_8 = arith.constant dense<0.000000e+00> : vector<8x128xf32>
    %9 = tpu.matmul %7, %8, %cst_8 {dimension_numbers = #tpu.dot_dimension_numbers<[1], [0], [0], [1], [0, 0, 1, 1], [], []>} : vector<8x256xf32>, vector<256x128xf32>, vector<8x128xf32> -> vector<8x128xf32>
    %c0_9 = arith.constant 0 : index
    %c0_10 = arith.constant 0 : index
    %10 = vector.load %arg5[%c0_9, %c0_10] : memref<1x128xf32, #tpu.memory_space<vmem>>, vector<1x128xf32>
    %11 = vector.broadcast %10 : vector<1x128xf32> to vector<8x128xf32>
    %12 = arith.addf %9, %11 : vector<8x128xf32>
    %cst_11 = arith.constant 0.000000e+00 : f32
    %13 = vector.broadcast %cst_11 : f32 to vector<8x128xf32>
    %14 = arith.maximumf %12, %13 : vector<8x128xf32>
    %c0_12 = arith.constant 0 : index
    %c0_13 = arith.constant 0 : index
    %15 = vector.load %arg6[%c0_12, %c0_13] : memref<128x128xf32, #tpu.memory_space<vmem>>, vector<128x128xf32>
    %cst_14 = arith.constant dense<0.000000e+00> : vector<8x128xf32>
    %16 = tpu.matmul %14, %15, %cst_14 {dimension_numbers = #tpu.dot_dimension_numbers<[1], [0], [0], [1], [0, 0, 1, 1], [], []>} : vector<8x128xf32>, vector<128x128xf32>, vector<8x128xf32> -> vector<8x128xf32>
    %c0_15 = arith.constant 0 : index
    %c0_16 = arith.constant 0 : index
    %17 = vector.load %arg7[%c0_15, %c0_16] : memref<1x128xf32, #tpu.memory_space<vmem>>, vector<1x128xf32>
    %18 = vector.broadcast %17 : vector<1x128xf32> to vector<8x128xf32>
    %19 = arith.addf %16, %18 : vector<8x128xf32>
    %c0_17 = arith.constant 0 : index
    %c0_18 = arith.constant 0 : index
    %20 = vector.load %arg8[%c0_17, %c0_18] : memref<8x128xf32, #tpu.memory_space<vmem>>, vector<8x128xf32>
    tpu.vector_store %arg8[%c0_17, %c0_18], %19 {strides = array<i32>} : memref<8x128xf32, #tpu.memory_space<vmem>>, vector<8x128xf32>,
    return
  }
  func.func @transform_0(%arg0: i32) -> (i32, i32) {
    %c0_i32 = arith.constant 0 : i32
    %c0_i32_0 = arith.constant 0 : i32
    return %arg0, %c0_i32 : i32, i32
  }
  func.func @transform_1(%arg0: i32) -> (i32, i32) {
    %c0_i32 = arith.constant 0 : i32
    %c0_i32_0 = arith.constant 0 : i32
    %c0_i32_1 = arith.constant 0 : i32
    return %c0_i32, %c0_i32_0 : i32, i32
  }
  func.func @transform_2(%arg0: i32) -> (i32, i32) {
    %c0_i32 = arith.constant 0 : i32
    %c0_i32_0 = arith.constant 0 : i32
    %c0_i32_1 = arith.constant 0 : i32
    return %c0_i32, %c0_i32_0 : i32, i32
  }
  func.func @transform_3(%arg0: i32) -> (i32, i32) {
    %c0_i32 = arith.constant 0 : i32
    %c0_i32_0 = arith.constant 0 : i32
    %c0_i32_1 = arith.constant 0 : i32
    return %c0_i32, %c0_i32_0 : i32, i32
  }
  func.func @transform_4(%arg0: i32) -> (i32, i32) {
    %c0_i32 = arith.constant 0 : i32
    %c0_i32_0 = arith.constant 0 : i32
    %c0_i32_1 = arith.constant 0 : i32
    return %c0_i32, %c0_i32_0 : i32, i32
  }
  func.func @transform_5(%arg0: i32) -> (i32, i32) {
    %c0_i32 = arith.constant 0 : i32
    %c0_i32_0 = arith.constant 0 : i32
    %c0_i32_1 = arith.constant 0 : i32
    return %c0_i32, %c0_i32_0 : i32, i32
  }
  func.func @transform_6(%arg0: i32) -> (i32, i32) {
    %c0_i32 = arith.constant 0 : i32
    %c0_i32_0 = arith.constant 0 : i32
    %c0_i32_1 = arith.constant 0 : i32
    return %c0_i32, %c0_i32_0 : i32, i32
  }
  func.func @transform_7(%arg0: i32) -> (i32, i32) {
    %c0_i32 = arith.constant 0 : i32
    %c0_i32_0 = arith.constant 0 : i32
    return %arg0, %c0_i32 : i32, i32
  }
}

</mosaic_0001>

<llo_original>
// kernel: dqn_forward.1
$region0: #{dqn_forward.1}
  #allocation0 [shape = 'u32[]', space=smem, size = 0x4, offset = 0x4, fixed_abs, tag = 'smem constant byte address 0x4 - core index']
  #allocation1 [shape = 'u32[144,128]{1,0:T(1,128)}', space=vmem, size = 0x12000, scoped, tag = 'internal scratch']
  %s0 = inlined_call_operand.vmem [shape: f32[8,8], index: 0, kind: input, shape index: {}]
  %s1 = inlined_call_operand.vmem [shape: f32[8,256], index: 1, kind: input, shape index: {}]
  %s2 = inlined_call_operand.vmem [shape: f32[1,256], index: 2, kind: input, shape index: {}]
  %s3 = inlined_call_operand.vmem [shape: f32[256,128], index: 3, kind: input, shape index: {}]
  %s4 = inlined_call_operand.vmem [shape: f32[1,128], index: 4, kind: input, shape index: {}]
  %s5 = inlined_call_operand.vmem [shape: f32[128,128], index: 5, kind: input, shape index: {}]
  %s6 = inlined_call_operand.vmem [shape: f32[1,128], index: 6, kind: input, shape index: {}]
  %s7 = inlined_call_operand.vmem [shape: f32[8,128], index: 7, kind: output, shape index: {}]
  %s8 = sld [smem:[#allocation0]]
  $region38: #{dqn_forward.1} parent=0
    _
  %s10 = ssub.s32 1, %s8
  %s11 = scalar_select 0, %s10, %s8
  // Predicated region
  $region2: #{dqn_forward.1} parent=0 // pred_check
    _
  $region3: #{dqn_forward.1} parent=0 // pred_check_branch
    %13 = sbr.rel (0) target = $region5
  $region4: #{dqn_forward.1} parent=0 // pred_region
    _
  $region5: #{dqn_forward.1} parent=0 // pred_fallthru
    _
  // Predicated region
  $region6: #{dqn_forward.1} parent=0 // pred_check
    _
  $region7: #{dqn_forward.1} parent=0 // pred_check_branch
    %15 = sbr.rel (0) target = $region9
  $region8: #{dqn_forward.1} parent=0 // pred_region
    _
  $region9: #{dqn_forward.1} parent=0 // pred_fallthru
    _
  // Predicated region
  $region10: #{dqn_forward.1} parent=0 // pred_check
    _
  $region11: #{dqn_forward.1} parent=0 // pred_check_branch
    %17 = sbr.rel (0) target = $region13
  $region12: #{dqn_forward.1} parent=0 // pred_region
    _
  $region13: #{dqn_forward.1} parent=0 // pred_fallthru
    _
  // Predicated region
  $region14: #{dqn_forward.1} parent=0 // pred_check
    _
  $region15: #{dqn_forward.1} parent=0 // pred_check_branch
    %19 = sbr.rel (0) target = $region17
  $region16: #{dqn_forward.1} parent=0 // pred_region
    _
  $region17: #{dqn_forward.1} parent=0 // pred_fallthru
    _
  // Predicated region
  $region18: #{dqn_forward.1} parent=0 // pred_check
    _
  $region19: #{dqn_forward.1} parent=0 // pred_check_branch
    %21 = sbr.rel (0) target = $region21
  $region20: #{dqn_forward.1} parent=0 // pred_region
    _
  $region21: #{dqn_forward.1} parent=0 // pred_fallthru
    _
  // Predicated region
  $region22: #{dqn_forward.1} parent=0 // pred_check
    _
  $region23: #{dqn_forward.1} parent=0 // pred_check_branch
    %23 = sbr.rel (0) target = $region25
  $region24: #{dqn_forward.1} parent=0 // pred_region
    _
  $region25: #{dqn_forward.1} parent=0 // pred_fallthru
    _
  // Predicated region
  $region26: #{dqn_forward.1} parent=0 // pred_check
    _
  $region27: #{dqn_forward.1} parent=0 // pred_check_branch
    %25 = sbr.rel (0) target = $region29
  $region28: #{dqn_forward.1} parent=0 // pred_region
    _
  $region29: #{dqn_forward.1} parent=0 // pred_fallthru
    _
  %v26 = vld [vmem:[%s0] sm:$0xff]
  %v27 = vld [vmem:[%s1] sm:$0xff]
  %v28 = vld [vmem:[%s1 + $0x8] sm:$0xff]
  %v29 = vld [vmem:[%s2] sm:$0x3]
  %v31 = vlaneseq
  %v32 = vshrl.u32 %v31, 7
  %v33 = vsub.s32 0, %v32
  %v34 = vrot.slane %v29, %v33
  %v35 = vlaneseq
  %v36 = vshrl.u32 %v35, 7
  %v37 = vsub.s32 1, %v36
  %v38 = vrot.slane %v29, %v37
  %vm41 = vcmask 64512
  %v43 = vsel %vm41, %v26, 0
  %45 = vmatprep.subr.mxu0 0.0
  %46 = vmatpush1.msra.mxu0 0.0
  %47 = vmatprep.subr.mxu0 0.0
  %48 = vmatpush1.msra.mxu0 0.0
  %49 = vmatprep.subr.mxu0 0.0
  %50 = vmatpush1.msra.mxu0 0.0
  %51 = vmatprep.subr.mxu0 0.0
  %52 = vmatpush1.msra.mxu0 0.0
  %53 = vmatprep.subr.mxu0 0.0
  %54 = vmatpush1.msra.mxu0 0.0
  %55 = vmatprep.subr.mxu0 0.0
  %56 = vmatpush1.msra.mxu0 0.0
  %57 = vmatprep.subr.mxu0 0.0
  %58 = vmatpush1.msra.mxu0 0.0
  %59 = vmatprep.subr.mxu0 0.0
  %60 = vmatpush1.msra.mxu0 0.0
  %61 = vmatprep.subr.mxu0 0.0
  %62 = vmatpush1.msra.mxu0 0.0
  %63 = vmatprep.subr.mxu0 0.0
  %64 = vmatpush1.msra.mxu0 0.0
  %65 = vmatprep.subr.mxu0 0.0
  %66 = vmatpush1.msra.mxu0 0.0
  %67 = vmatprep.subr.mxu0 0.0
  %68 = vmatpush1.msra.mxu0 0.0
  %69 = vmatprep.subr.mxu0 0.0
  %70 = vmatpush1.msra.mxu0 0.0
  %71 = vmatprep.subr.mxu0 0.0
  %72 = vmatpush1.msra.mxu0 0.0
  %73 = vmatprep.subr.mxu0 0.0
  %74 = vmatpush1.msra.mxu0 0.0
  %75 = vmatprep.subr.mxu0 %v28
  %76 = vmatpush1.msra.mxu0 %v27
  %77 = vmatprep.subr.mxu0 0.0
  %78 = vmatpush2.msra.mxu0 0.0
  %79 = vmatprep.subr.mxu0 0.0
  %80 = vmatpush2.msra.mxu0 0.0
  %81 = vmatprep.subr.mxu0 0.0
  %82 = vmatpush2.msra.mxu0 0.0
  %83 = vmatprep.subr.mxu0 0.0
  %84 = vmatpush2.msra.mxu0 0.0
  %85 = vmatprep.subr.mxu0 0.0
  %86 = vmatpush2.msra.mxu0 0.0
  %87 = vmatprep.subr.mxu0 0.0
  %88 = vmatpush2.msra.mxu0 0.0
  %89 = vmatprep.subr.mxu0 0.0
  %90 = vmatpush2.msra.mxu0 0.0
  %91 = vmatprep.subr.mxu0 0.0
  %92 = vmatpush2.msra.mxu0 0.0
  %93 = vmatprep.subr.mxu0 0.0
  %94 = vmatpush2.msra.mxu0 0.0
  %95 = vmatprep.subr.mxu0 0.0
  %96 = vmatpush2.msra.mxu0 0.0
  %97 = vmatprep.subr.mxu0 0.0
  %98 = vmatpush2.msra.mxu0 0.0
  %99 = vmatprep.subr.mxu0 0.0
  %100 = vmatpush2.msra.mxu0 0.0
  %101 = vmatprep.subr.mxu0 0.0
  %102 = vmatpush2.msra.mxu0 0.0
  %103 = vmatprep.subr.mxu0 0.0
  %104 = vmatpush2.msra.mxu0 0.0
  %105 = vmatprep.subr.mxu0 0.0
  %106 = vmatpush2.msra.mxu0 0.0
  %107 = vmatprep.subr.mxu0 0.0
  %108 = vmatpush2.msra.mxu0 0.0
  %109 = vmatprep.mubr.f32.mxu0 0.0
  %110 = vmatmul.mubr.f32.gmra.mxu0 %v43
  %v111 = vpop.f32.mrf.mxu0
  %v112 = vadd.f32 %v34, %v111
  %v113 = vpop.f32.mrf.mxu0
  %v114 = vadd.f32 %v38, %v113
  %115 = vdwg.mxu0
  %v116 = vmax.f32 %v112, 0.0
  %v117 = vmax.f32 %v114, 0.0
  %v118 = vld [vmem:[%s3] sm:$0xff]
  %v119 = vld [vmem:[%s3 + $0x8] sm:$0xff]
  %v120 = vld [vmem:[%s3 + $0x10] sm:$0xff]
  %v121 = vld [vmem:[%s3 + $0x18] sm:$0xff]
  %v122 = vld [vmem:[%s3 + $0x20] sm:$0xff]
  %v123 = vld [vmem:[%s3 + $0x28] sm:$0xff]
  %v124 = vld [vmem:[%s3 + $0x30] sm:$0xff]
  %v125 = vld [vmem:[%s3 + $0x38] sm:$0xff]
  %v126 = vld [vmem:[%s3 + $0x40] sm:$0xff]
  %v127 = vld [vmem:[%s3 + $0x48] sm:$0xff]
  %v128 = vld [vmem:[%s3 + $0x50] sm:$0xff]
  %v129 = vld [vmem:[%s3 + $0x58] sm:$0xff]
  %v130 = vld [vmem:[%s3 + $0x60] sm:$0xff]
  %v131 = vld [vmem:[%s3 + $0x68] sm:$0xff]
  %v132 = vld [vmem:[%s3 + $0x70] sm:$0xff]
  %v133 = vld [vmem:[%s3 + $0x78] sm:$0xff]
  %v134 = vld [vmem:[%s3 + $0x80] sm:$0xff]
  %v135 = vld [vmem:[%s3 + $0x88] sm:$0xff]
  %v136 = vld [vmem:[%s3 + $0x90] sm:$0xff]
  %v137 = vld [vmem:[%s3 + $0x98] sm:$0xff]
  %v138 = vld [vmem:[%s3 + $0xa0] sm:$0xff]
  %v139 = vld [vmem:[%s3 + $0xa8] sm:$0xff]
  %v140 = vld [vmem:[%s3 + $0xb0] sm:$0xff]
  %v141 = vld [vmem:[%s3 + $0xb8] sm:$0xff]
  %v142 = vld [vmem:[%s3 + $0xc0] sm:$0xff]
  %v143 = vld [vmem:[%s3 + $0xc8] sm:$0xff]
  %v144 = vld [vmem:[%s3 + $0xd0] sm:$0xff]
  %v145 = vld [vmem:[%s3 + $0xd8] sm:$0xff]
  %v146 = vld [vmem:[%s3 + $0xe0] sm:$0xff]
  %v147 = vld [vmem:[%s3 + $0xe8] sm:$0xff]
  %v148 = vld [vmem:[%s3 + $0xf0] sm:$0xff]
  %v149 = vld [vmem:[%s3 + $0xf8] sm:$0xff]
  %v150 = vld [vmem:[%s4] sm:$0x1]
  %v152 = vlaneseq
  %v153 = vshrl.u32 %v152, 7
  %v154 = vsub.s32 0, %v153
  %v155 = vrot.slane %v150, %v154
  %157 = vmatprep.subr.mxu0 0.0
  %158 = vmatpush1.msra.mxu0 %v133
  %159 = vmatprep.subr.mxu0 0.0
  %160 = vmatpush1.msra.mxu0 %v132
  %161 = vmatprep.subr.mxu0 0.0
  %162 = vmatpush1.msra.mxu0 %v131
  %163 = vmatprep.subr.mxu0 0.0
  %164 = vmatpush1.msra.mxu0 %v130
  %165 = vmatprep.subr.mxu0 0.0
  %166 = vmatpush1.msra.mxu0 %v129
  %167 = vmatprep.subr.mxu0 0.0
  %168 = vmatpush1.msra.mxu0 %v128
  %169 = vmatprep.subr.mxu0 0.0
  %170 = vmatpush1.msra.mxu0 %v127
  %171 = vmatprep.subr.mxu0 0.0
  %172 = vmatpush1.msra.mxu0 %v126
  %173 = vmatprep.subr.mxu0 0.0
  %174 = vmatpush1.msra.mxu0 %v125
  %175 = vmatprep.subr.mxu0 0.0
  %176 = vmatpush1.msra.mxu0 %v124
  %177 = vmatprep.subr.mxu0 0.0
  %178 = vmatpush1.msra.mxu0 %v123
  %179 = vmatprep.subr.mxu0 0.0
  %180 = vmatpush1.msra.mxu0 %v122
  %181 = vmatprep.subr.mxu0 0.0
  %182 = vmatpush1.msra.mxu0 %v121
  %183 = vmatprep.subr.mxu0 0.0
  %184 = vmatpush1.msra.mxu0 %v120
  %185 = vmatprep.subr.mxu0 0.0
  %186 = vmatpush1.msra.mxu0 %v119
  %187 = vmatprep.subr.mxu0 0.0
  %188 = vmatpush1.msra.mxu0 %v118
  %189 = vmatprep.subr.mxu0 0.0
  %190 = vmatpush2.msra.mxu0 %v149
  %191 = vmatprep.subr.mxu0 0.0
  %192 = vmatpush2.msra.mxu0 %v148
  %193 = vmatprep.subr.mxu0 0.0
  %194 = vmatpush2.msra.mxu0 %v147
  %195 = vmatprep.subr.mxu0 0.0
  %196 = vmatpush2.msra.mxu0 %v146
  %197 = vmatprep.subr.mxu0 0.0
  %198 = vmatpush2.msra.mxu0 %v145
  %199 = vmatprep.subr.mxu0 0.0
  %200 = vmatpush2.msra.mxu0 %v144
  %201 = vmatprep.subr.mxu0 0.0
  %202 = vmatpush2.msra.mxu0 %v143
  %203 = vmatprep.subr.mxu0 0.0
  %204 = vmatpush2.msra.mxu0 %v142
  %205 = vmatprep.subr.mxu0 0.0
  %206 = vmatpush2.msra.mxu0 %v141
  %207 = vmatprep.subr.mxu0 0.0
  %208 = vmatpush2.msra.mxu0 %v140
  %209 = vmatprep.subr.mxu0 0.0
  %210 = vmatpush2.msra.mxu0 %v139
  %211 = vmatprep.subr.mxu0 0.0
  %212 = vmatpush2.msra.mxu0 %v138
  %213 = vmatprep.subr.mxu0 0.0
  %214 = vmatpush2.msra.mxu0 %v137
  %215 = vmatprep.subr.mxu0 0.0
  %216 = vmatpush2.msra.mxu0 %v136
  %217 = vmatprep.subr.mxu0 0.0
  %218 = vmatpush2.msra.mxu0 %v135
  %219 = vmatprep.subr.mxu0 0.0
  %220 = vmatpush2.msra.mxu0 %v134
  %221 = vmatprep.mubr.f32.mxu0 %v117
  %222 = vmatmul.mubr.f32.gmra.mxu0 %v116
  %v223 = vpop.f32.mrf.mxu0
  %v224 = vadd.f32 %v155, %v223
  %v225 = vpop.f32.mrf.mxu0
  %226 = vdwg.mxu0
  %v227 = vmax.f32 %v224, 0.0
  %v228 = vld [vmem:[%s5] sm:$0xff]
  %v229 = vld [vmem:[%s5 + $0x8] sm:$0xff]
  %v230 = vld [vmem:[%s5 + $0x10] sm:$0xff]
  %v231 = vld [vmem:[%s5 + $0x18] sm:$0xff]
  %v232 = vld [vmem:[%s5 + $0x20] sm:$0xff]
  %v233 = vld [vmem:[%s5 + $0x28] sm:$0xff]
  %v234 = vld [vmem:[%s5 + $0x30] sm:$0xff]
  %v235 = vld [vmem:[%s5 + $0x38] sm:$0xff]
  %v236 = vld [vmem:[%s5 + $0x40] sm:$0xff]
  %v237 = vld [vmem:[%s5 + $0x48] sm:$0xff]
  %v238 = vld [vmem:[%s5 + $0x50] sm:$0xff]
  %v239 = vld [vmem:[%s5 + $0x58] sm:$0xff]
  %v240 = vld [vmem:[%s5 + $0x60] sm:$0xff]
  %v241 = vld [vmem:[%s5 + $0x68] sm:$0xff]
  %v242 = vld [vmem:[%s5 + $0x70] sm:$0xff]
  %v243 = vld [vmem:[%s5 + $0x78] sm:$0xff]
  %v244 = vld [vmem:[%s6] sm:$0x1]
  %v246 = vlaneseq
  %v247 = vshrl.u32 %v246, 7
  %v248 = vsub.s32 0, %v247
  %v249 = vrot.slane %v244, %v248
  %251 = vmatprep.subr.mxu0 0.0
  %252 = vmatpush1.msra.mxu0 %v243
  %253 = vmatprep.subr.mxu0 0.0
  %254 = vmatpush1.msra.mxu0 %v242
  %255 = vmatprep.subr.mxu0 0.0
  %256 = vmatpush1.msra.mxu0 %v241
  %257 = vmatprep.subr.mxu0 0.0
  %258 = vmatpush1.msra.mxu0 %v240
  %259 = vmatprep.subr.mxu0 0.0
  %260 = vmatpush1.msra.mxu0 %v239
  %261 = vmatprep.subr.mxu0 0.0
  %262 = vmatpush1.msra.mxu0 %v238
  %263 = vmatprep.subr.mxu0 0.0
  %264 = vmatpush1.msra.mxu0 %v237
  %265 = vmatprep.subr.mxu0 0.0
  %266 = vmatpush1.msra.mxu0 %v236
  %267 = vmatprep.subr.mxu0 0.0
  %268 = vmatpush1.msra.mxu0 %v235
  %269 = vmatprep.subr.mxu0 0.0
  %270 = vmatpush1.msra.mxu0 %v234
  %271 = vmatprep.subr.mxu0 0.0
  %272 = vmatpush1.msra.mxu0 %v233
  %273 = vmatprep.subr.mxu0 0.0
  %274 = vmatpush1.msra.mxu0 %v232
  %275 = vmatprep.subr.mxu0 0.0
  %276 = vmatpush1.msra.mxu0 %v231
  %277 = vmatprep.subr.mxu0 0.0
  %278 = vmatpush1.msra.mxu0 %v230
  %279 = vmatprep.subr.mxu0 0.0
  %280 = vmatpush1.msra.mxu0 %v229
  %281 = vmatprep.subr.mxu0 0.0
  %282 = vmatpush1.msra.mxu0 %v228
  %283 = vmatprep.subr.mxu0 0.0
  %284 = vmatpush2.msra.mxu0 0.0
  %285 = vmatprep.subr.mxu0 0.0
  %286 = vmatpush2.msra.mxu0 0.0
  %287 = vmatprep.subr.mxu0 0.0
  %288 = vmatpush2.msra.mxu0 0.0
  %289 = vmatprep.subr.mxu0 0.0
  %290 = vmatpush2.msra.mxu0 0.0
  %291 = vmatprep.subr.mxu0 0.0
  %292 = vmatpush2.msra.mxu0 0.0
  %293 = vmatprep.subr.mxu0 0.0
  %294 = vmatpush2.msra.mxu0 0.0
  %295 = vmatprep.subr.mxu0 0.0
  %296 = vmatpush2.msra.mxu0 0.0
  %297 = vmatprep.subr.mxu0 0.0
  %298 = vmatpush2.msra.mxu0 0.0
  %299 = vmatprep.subr.mxu0 0.0
  %300 = vmatpush2.msra.mxu0 0.0
  %301 = vmatprep.subr.mxu0 0.0
  %302 = vmatpush2.msra.mxu0 0.0
  %303 = vmatprep.subr.mxu0 0.0
  %304 = vmatpush2.msra.mxu0 0.0
  %305 = vmatprep.subr.mxu0 0.0
  %306 = vmatpush2.msra.mxu0 0.0
  %307 = vmatprep.subr.mxu0 0.0
  %308 = vmatpush2.msra.mxu0 0.0
  %309 = vmatprep.subr.mxu0 0.0
  %310 = vmatpush2.msra.mxu0 0.0
  %311 = vmatprep.subr.mxu0 0.0
  %312 = vmatpush2.msra.mxu0 0.0
  %313 = vmatprep.subr.mxu0 0.0
  %314 = vmatpush2.msra.mxu0 0.0
  %315 = vmatprep.mubr.f32.mxu0 0.0
  %316 = vmatmul.mubr.f32.gmra.mxu0 %v227
  %v317 = vpop.f32.mrf.mxu0
  %v318 = vadd.f32 %v249, %v317
  %v319 = vpop.f32.mrf.mxu0
  %320 = vdwg.mxu0
  %321 = vst [vmem:[%s7] sm:$0xff] %v318
  // Predicated region
  $region30: #{dqn_forward.1} parent=0 // pred_check
    _
  $region31: #{dqn_forward.1} parent=0 // pred_check_branch
    %323 = sbr.rel (0) target = $region33
  $region32: #{dqn_forward.1} parent=0 // pred_region
    _
  $region33: #{dqn_forward.1} parent=0 // pred_fallthru
    _
  // Predicated region
  $region34: #{dqn_forward.1} parent=0 // pred_check
    _
  $region35: #{dqn_forward.1} parent=0 // pred_check_branch
    %325 = sbr.rel (0) target = $region37
  $region36: #{dqn_forward.1} parent=0 // pred_region
    _
  $region37: #{dqn_forward.1} parent=0 // pred_fallthru
    _

</llo_original>
